<compile_context>
chip_gen: v7x
topology: tpu7x:2x2x1
jax: 0.10.0
libtpu: 0.0.40
codegen_flags: <defaults>
</compile_context>

<pallas_src>
import numpy as np
import jax
import jax.numpy as jnp
from jax.experimental import pallas as pl
from jax.experimental.pallas import tpu as pltpu


def _round_up(a, b):
    return (a + b - 1) // b * b


def _selfloop_linear_kernel(x_ref, w_ref, b_ref, o_ref, acc_ref):
    """One grid step of out = x @ W + b.

    x_ref : (TILE_N, TILE_K)   node-feature tile
    w_ref : (TILE_K, TILE_CO)  weight tile
    b_ref : (1, TILE_CO)       bias tile (broadcast over nodes)
    o_ref : (TILE_N, TILE_CO)  output tile (written on last reduction step)
    acc_ref: (TILE_N, TILE_CO) f32 accumulator scratch (persists over k axis)
    """
    k = pl.program_id(2)

    @pl.when(k == 0)
    def _init():
        acc_ref[...] = jnp.zeros_like(acc_ref)

    # MXU matmul, f32 accumulation.
    acc_ref[...] += jnp.dot(
        x_ref[...], w_ref[...], preferred_element_type=jnp.float32
    )

    @pl.when(k == pl.num_programs(2) - 1)
    def _finalize():
        o_ref[...] = (acc_ref[...] + b_ref[...]).astype(o_ref.dtype)


def conv_block10_forward(x, weight, bias, *, tile_n=128, tile_k=128, tile_co=128):
    """JAX/Pallas equivalent of _ConvBlock10.forward (== SelfLoopLayer).

    x:      (N, Cin)  float32 node features
    weight: (Cin, Cout) float32 self-loop weight matrix
    bias:   (Cout,)   float32 bias
    returns (N, Cout) float32
    """
    n, cin = x.shape
    cout = weight.shape[1]

    # Pad: node axis to the node tile, channel axes to 128 (lane-dense MXU
    # operands, unmasked stores). Zero pad on the contraction dim is exact.
    n_p = _round_up(n, tile_n)
    k_p = _round_up(cin, tile_k)
    co_p = _round_up(cout, tile_co)

    x_p = jnp.zeros((n_p, k_p), jnp.float32).at[:n, :cin].set(
        x.astype(jnp.float32))
    w_p = jnp.zeros((k_p, co_p), jnp.float32).at[:cin, :cout].set(
        weight.astype(jnp.float32))
    b_p = jnp.zeros((1, co_p), jnp.float32).at[:, :cout].set(
        bias.reshape(1, cout).astype(jnp.float32))

    grid = (n_p // tile_n, co_p // tile_co, k_p // tile_k)

    cost = pl.CostEstimate(
        flops=2 * n_p * k_p * co_p,
        transcendentals=0,
        bytes_accessed=4 * (n_p * k_p + k_p * co_p + co_p + n_p * co_p),
    )

    out_p = pl.pallas_call(
        _selfloop_linear_kernel,
        out_shape=jax.ShapeDtypeStruct((n_p, co_p), jnp.float32),
        grid_spec=pltpu.PrefetchScalarGridSpec(
            num_scalar_prefetch=0,
            grid=grid,
            in_specs=[
                pl.BlockSpec((tile_n, tile_k), lambda i, j, k: (i, k)),
                pl.BlockSpec((tile_k, tile_co), lambda i, j, k: (k, j)),
                pl.BlockSpec((1, tile_co), lambda i, j, k: (0, j)),
            ],
            out_specs=pl.BlockSpec((tile_n, tile_co), lambda i, j, k: (i, j)),
            scratch_shapes=[pltpu.VMEM((tile_n, tile_co), jnp.float32)],
        ),
        compiler_params=pltpu.CompilerParams(
            # Node / out-channel tiles are independent (megacore-shardable on
            # v7x); the in-channel reduction axis must stay "arbitrary".
            dimension_semantics=("parallel", "parallel", "arbitrary"),
        ),
        cost_estimate=cost,
    )(x_p, w_p, b_p)

    return out_p[:n, :cout]


if __name__ == "__main__":
    # Small deterministic example consistent with a graph-node feature block:
    # 300 mesh nodes, 48 input channels, 96 output channels (exercises the
    # padding path: 300 -> 384 nodes, 48 -> 128, 96 -> 128 channels).
    NUM_NODES, IN_CH, OUT_CH = 300, 48, 96

    key = jax.random.PRNGKey(0)
    kx, kw, kb = jax.random.split(key, 3)

    x = jax.random.normal(kx, (NUM_NODES, IN_CH), dtype=jnp.float32)
    weight = jax.random.normal(kw, (IN_CH, OUT_CH), dtype=jnp.float32) / np.sqrt(IN_CH)
    bias = jax.random.normal(kb, (OUT_CH,), dtype=jnp.float32) * 0.1

    out = conv_block10_forward(x, weight, bias)
    out = jax.block_until_ready(out)

    # Pure-numpy float64 reference for correctness.
    ref = (np.asarray(x, np.float64) @ np.asarray(weight, np.float64)
           + np.asarray(bias, np.float64))
    np.testing.assert_allclose(np.asarray(out, np.float64), ref,
                               rtol=1e-3, atol=1e-3)

    print("KERNEL_OK")
</pallas_src>

<mosaic_0001>
module attributes {stable_mosaic.version = 11 : i64} {
  func.func @_selfloop_linear_kernel(%arg0: i32, %arg1: i32, %arg2: i32, %arg3: memref<128x128xf32, #tpu.memory_space<vmem>>, %arg4: memref<128x128xf32, #tpu.memory_space<vmem>>, %arg5: memref<1x128xf32, #tpu.memory_space<vmem>>, %arg6: memref<128x128xf32, #tpu.memory_space<vmem>>, %arg7: memref<128x128xf32, #tpu.memory_space<vmem>>) attributes {dimension_semantics = [#tpu.dimension_semantics<parallel>, #tpu.dimension_semantics<parallel>, #tpu.dimension_semantics<arbitrary>], iteration_bounds = array<i64: 3, 1, 1>, scalar_prefetch = 0 : i64, scratch_operands = 1 : i64, tpu.core_type = #tpu.core_type<tc>, window_params = [{transform_indices = @transform_0, window_bounds = array<i64: 128, 128>}, {transform_indices = @transform_1, window_bounds = array<i64: 128, 128>}, {transform_indices = @transform_2, window_bounds = array<i64: 1, 128>}, {transform_indices = @transform_3, window_bounds = array<i64: 128, 128>}]} {
    %c0_i32 = arith.constant 0 : i32
    %0 = arith.cmpi eq, %arg2, %c0_i32 : i32
    %1 = arith.extui %0 : i1 to i32
    %c0_i32_0 = arith.constant 0 : i32
    %2 = arith.cmpi ne, %1, %c0_i32_0 : i32
    scf.if %2 {
      %cst_10 = arith.constant 0.000000e+00 : f32
      %12 = vector.broadcast %cst_10 : f32 to vector<128x128xf32>
      %c0_11 = arith.constant 0 : index
      %c0_12 = arith.constant 0 : index
      %13 = vector.load %arg7[%c0_11, %c0_12] : memref<128x128xf32, #tpu.memory_space<vmem>>, vector<128x128xf32>
      tpu.vector_store %arg7[%c0_11, %c0_12], %12 {strides = array<i32>} : memref<128x128xf32, #tpu.memory_space<vmem>>, vector<128x128xf32>,
    } else {
    }
    %c0 = arith.constant 0 : index
    %c0_1 = arith.constant 0 : index
    %3 = vector.load %arg7[%c0, %c0_1] : memref<128x128xf32, #tpu.memory_space<vmem>>, vector<128x128xf32>
    %c0_2 = arith.constant 0 : index
    %c0_3 = arith.constant 0 : index
    %4 = vector.load %arg3[%c0_2, %c0_3] : memref<128x128xf32, #tpu.memory_space<vmem>>, vector<128x128xf32>
    %c0_4 = arith.constant 0 : index
    %c0_5 = arith.constant 0 : index
    %5 = vector.load %arg4[%c0_4, %c0_5] : memref<128x128xf32, #tpu.memory_space<vmem>>, vector<128x128xf32>
    %cst = arith.constant dense<0.000000e+00> : vector<128x128xf32>
    %6 = tpu.matmul %4, %5, %cst {dimension_numbers = #tpu.dot_dimension_numbers<[1], [0], [0], [1], [0, 0, 1, 1], [], []>} : vector<128x128xf32>, vector<128x128xf32>, vector<128x128xf32> -> vector<128x128xf32>
    %7 = arith.addf %3, %6 : vector<128x128xf32>
    %c0_6 = arith.constant 0 : index
    %c0_7 = arith.constant 0 : index
    %8 = vector.load %arg7[%c0_6, %c0_7] : memref<128x128xf32, #tpu.memory_space<vmem>>, vector<128x128xf32>
    tpu.vector_store %arg7[%c0_6, %c0_7], %7 {strides = array<i32>} : memref<128x128xf32, #tpu.memory_space<vmem>>, vector<128x128xf32>,
    %c0_i32_8 = arith.constant 0 : i32
    %9 = arith.cmpi eq, %arg2, %c0_i32_8 : i32
    %10 = arith.extui %9 : i1 to i32
    %c0_i32_9 = arith.constant 0 : i32
    %11 = arith.cmpi ne, %10, %c0_i32_9 : i32
    scf.if %11 {
      %c0_10 = arith.constant 0 : index
      %c0_11 = arith.constant 0 : index
      %12 = vector.load %arg7[%c0_10, %c0_11] : memref<128x128xf32, #tpu.memory_space<vmem>>, vector<128x128xf32>
      %c0_12 = arith.constant 0 : index
      %c0_13 = arith.constant 0 : index
      %13 = vector.load %arg5[%c0_12, %c0_13] : memref<1x128xf32, #tpu.memory_space<vmem>>, vector<1x128xf32>
      %14 = vector.broadcast %13 : vector<1x128xf32> to vector<128x128xf32>
      %15 = arith.addf %12, %14 : vector<128x128xf32>
      %c0_14 = arith.constant 0 : index
      %c0_15 = arith.constant 0 : index
      %16 = vector.load %arg6[%c0_14, %c0_15] : memref<128x128xf32, #tpu.memory_space<vmem>>, vector<128x128xf32>
      tpu.vector_store %arg6[%c0_14, %c0_15], %15 {strides = array<i32>} : memref<128x128xf32, #tpu.memory_space<vmem>>, vector<128x128xf32>,
    } else {
    }
    return
  }
  func.func @transform_0(%arg0: i32, %arg1: i32, %arg2: i32) -> (i32, i32) {
    %c0_i32 = arith.constant 0 : i32
    return %arg0, %arg2 : i32, i32
  }
  func.func @transform_1(%arg0: i32, %arg1: i32, %arg2: i32) -> (i32, i32) {
    %c0_i32 = arith.constant 0 : i32
    return %arg2, %arg1 : i32, i32
  }
  func.func @transform_2(%arg0: i32, %arg1: i32, %arg2: i32) -> (i32, i32) {
    %c0_i32 = arith.constant 0 : i32
    %c0_i32_0 = arith.constant 0 : i32
    return %c0_i32, %arg1 : i32, i32
  }
  func.func @transform_3(%arg0: i32, %arg1: i32, %arg2: i32) -> (i32, i32) {
    %c0_i32 = arith.constant 0 : i32
    return %arg0, %arg1 : i32, i32
  }
}

</mosaic_0001>

<llo_original>
// kernel: tpu_custom_call.1
$region0: #{tpu_custom_call.1}
  #allocation0 [shape = 'u32[]', space=smem, size = 0x4, offset = 0x4, fixed_abs, tag = 'smem constant byte address 0x4 - core index']
  #allocation1 [shape = 'u32[144,128]{1,0:T(1,128)}', space=vmem, size = 0x12000, scoped, tag = 'internal scratch']
  #allocation2 [shape = 'f32[128,128]{1,0:T(8,128)}', space=vmem, size = 0x10000, scoped, tag = 'scratch operand']
  %s0 = inlined_call_operand.hbm [shape: f32[384,128], index: 0, kind: input, shape index: {}]
  %s1 = inlined_call_operand.hbm [shape: f32[128,128], index: 1, kind: input, shape index: {}]
  %s2 = inlined_call_operand.vmem [shape: f32[1,128], index: 2, kind: input, shape index: {}]
  %s3 = inlined_call_operand.hbm [shape: f32[384,128], index: 3, kind: output, shape index: {}]
  %s4 = sld [smem:[#allocation0]]
  $region61: #{tpu_custom_call.1} parent=0
    _
  %s6 = ssub.s32 1, %s4
  %s7 = scalar_select 0, %s6, %s4
  $region1: #{tpu_custom_call.1} parent=0
    #allocation3 [shape = 'u8[131072]{0}', space=vmem, size = 0x20000, scoped, tag = 'input window, operand 0']
    #allocation4 [shape = 's32[2]{0}', space=sflag, size = 0x8, scoped, tag = 'scoped memory for tpu_custom_call.1']
    #allocation5 [shape = 's32[2]{0}', space=sflag, size = 0x8, scoped, tag = 'scoped memory for tpu_custom_call.1']
    #allocation6 [shape = 'u8[65536]{0}', space=vmem, size = 0x10000, scoped, tag = 'input window, operand 1, single buffered']
    #allocation7 [shape = 's32[1]{0}', space=sflag, size = 0x4, scoped, tag = 'scoped memory for tpu_custom_call.1']
    #allocation8 [shape = 'u8[131072]{0}', space=vmem, size = 0x20000, scoped, tag = 'output window, operand 0']
    %8 = vsyncpa [#allocation4], 0
    %s9 = scalar_lea.sflag [#allocation4], 1
    %10 = vsyncpa %s9, 0
    %11 = vsyncpa [#allocation7], 0
    %12 = vsyncpa [#allocation5], 0
    %s13 = scalar_lea.sflag [#allocation5], 1
    %14 = vsyncpa %s13, 0
    loop: start=0, step=1, limit=5
    $region2: #{tpu_custom_call.1} parent=1 // loop_pre_header
      _
    $region3: #{tpu_custom_call.1} parent=1 // loop_header
      %s16 = sphi 0, %s20
      %p17 = scmp.ge.s32.totalorder %s16, 5
      %s23 = sphi 0, %s42
      %s24 = sphi 0, %s38
      %s25 = sphi 0, %s34
      %s26 = sphi 0, %s23
      %s27 = sphi 0, %s24
      %s28 = sphi 0, %s25
      %s29 = sphi 0, %s26
      %s30 = sphi 0, %s27
      %s31 = sphi 0, %s28
      %s47 = sphi 0, %s49
      %s50 = sphi 0, %s47
      %s51 = sphi 0, %s50
      %s67 = sphi 0, %s51
      %s75 = sphi 0, %s77
      %s78 = sphi 0, %s75
      %s79 = sphi 0, %s78
      %s95 = sphi 0, %s79
      %s101 = sphi 0, %s103
      %s104 = sphi 0, %s101
      %s105 = sphi 0, %s104
      %s121 = sphi 0, %s105
      %s129 = sphi 0, %s131
      %s132 = sphi 0, %s129
      %s133 = sphi 0, %s132
      %s149 = sphi 0, %s133
    $region4: #{tpu_custom_call.1} parent=1 // loop_header_branch
      %19 = sbr.rel (%p17) target = $region8
    $region5: #{tpu_custom_call.1} parent=1 // loop_body
      %s21 = ssub.s32 %s16, 1
      %s22 = ssub.s32 %s16, 2
      %s32 = sadd.s32 1, %s25
      %p33 = scmp.ge.s32.totalorder %s32, 1
      %s34 = scalar_select %p33, 0, %s32
      %s35 = sadd.s32 1, %s24
      %s36 = scalar_select %p33, %s35, %s24
      %p37 = scmp.ge.s32.totalorder %s36, 1
      %s38 = scalar_select %p37, 0, %s36
      %s39 = sadd.s32 1, %s23
      %s40 = scalar_select %p37, %s39, %s23
      %p41 = scmp.ge.s32.totalorder %s40, 3
      %s42 = scalar_select %p41, 0, %s40
      %s43 = ssub.s32 %s23, %s42
      %s44 = ssub.s32 %s25, %s34
      %s45 = sor.u32 %s43, %s44
      %p46 = scmp.eq.s32.totalorder %s45, 0
      %s48 = sadd.s32 %s47, 1
      %s49 = scalar_select %p46, %s47, %s48
      %p52 = pneg %p46
      %p53 = scmp.eq.s32.totalorder %s16, 2
      %p54 = por %p52, %p53
      %p55 = scmp.ne.s32.totalorder %s47, %s50
      %p56 = scmp.eq.s32.totalorder %s16, 0
      %p57 = por %p55, %p56
      %p58 = scmp.ne.s32.totalorder %s47, %s50
      %p59 = scmp.eq.s32.totalorder %s21, 2
      %p60 = por %p58, %p59
      %p61 = scmp.ne.s32.totalorder %s50, %s51
      %p62 = scmp.eq.s32.totalorder %s21, 0
      %p63 = por %p61, %p62
      %p64 = scmp.ne.s32.totalorder %s50, %s51
      %p65 = scmp.eq.s32.totalorder %s22, 2
      %p66 = por %p64, %p65
      %p68 = scmp.ne.s32.totalorder %s51, %s67
      %p69 = scmp.eq.s32.totalorder %s22, 0
      %p70 = por %p68, %p69
      %s71 = ssub.s32 %s25, %s34
      %s72 = ssub.s32 %s24, %s38
      %s73 = sor.u32 %s71, %s72
      %p74 = scmp.eq.s32.totalorder %s73, 0
      %s76 = sadd.s32 %s75, 1
      %s77 = scalar_select %p74, %s75, %s76
      %p80 = pneg %p74
      %p81 = scmp.eq.s32.totalorder %s16, 2
      %p82 = por %p80, %p81
      %p83 = scmp.ne.s32.totalorder %s75, %s78
      %p84 = scmp.eq.s32.totalorder %s16, 0
      %p85 = por %p83, %p84
      %p86 = scmp.ne.s32.totalorder %s75, %s78
      %p87 = scmp.eq.s32.totalorder %s21, 2
      %p88 = por %p86, %p87
      %p89 = scmp.ne.s32.totalorder %s78, %s79
      %p90 = scmp.eq.s32.totalorder %s21, 0
      %p91 = por %p89, %p90
      %p92 = scmp.ne.s32.totalorder %s78, %s79
      %p93 = scmp.eq.s32.totalorder %s22, 2
      %p94 = por %p92, %p93
      %p96 = scmp.ne.s32.totalorder %s79, %s95
      %p97 = scmp.eq.s32.totalorder %s22, 0
      %p98 = por %p96, %p97
      %s99 = ssub.s32 %s24, %s38
      %p100 = scmp.eq.s32.totalorder %s99, 0
      %s102 = sadd.s32 %s101, 1
      %s103 = scalar_select %p100, %s101, %s102
      %p106 = pneg %p100
      %p107 = scmp.eq.s32.totalorder %s16, 2
      %p108 = por %p106, %p107
      %p109 = scmp.ne.s32.totalorder %s101, %s104
      %p110 = scmp.eq.s32.totalorder %s16, 0
      %p111 = por %p109, %p110
      %p112 = scmp.ne.s32.totalorder %s101, %s104
      %p113 = scmp.eq.s32.totalorder %s21, 2
      %p114 = por %p112, %p113
      %p115 = scmp.ne.s32.totalorder %s104, %s105
      %p116 = scmp.eq.s32.totalorder %s21, 0
      %p117 = por %p115, %p116
      %p118 = scmp.ne.s32.totalorder %s104, %s105
      %p119 = scmp.eq.s32.totalorder %s22, 2
      %p120 = por %p118, %p119
      %p122 = scmp.ne.s32.totalorder %s105, %s121
      %p123 = scmp.eq.s32.totalorder %s22, 0
      %p124 = por %p122, %p123
      %s125 = ssub.s32 %s23, %s42
      %s126 = ssub.s32 %s24, %s38
      %s127 = sor.u32 %s125, %s126
      %p128 = scmp.eq.s32.totalorder %s127, 0
      %s130 = sadd.s32 %s129, 1
      %s131 = scalar_select %p128, %s129, %s130
      %p134 = pneg %p128
      %p135 = scmp.eq.s32.totalorder %s16, 2
      %p136 = por %p134, %p135
      %p137 = scmp.ne.s32.totalorder %s129, %s132
      %p138 = scmp.eq.s32.totalorder %s16, 0
      %p139 = por %p137, %p138
      %p140 = scmp.ne.s32.totalorder %s129, %s132
      %p141 = scmp.eq.s32.totalorder %s21, 2
      %p142 = por %p140, %p141
      %p143 = scmp.ne.s32.totalorder %s132, %s133
      %p144 = scmp.eq.s32.totalorder %s21, 0
      %p145 = por %p143, %p144
      %p146 = scmp.ne.s32.totalorder %s132, %s133
      %p147 = scmp.eq.s32.totalorder %s22, 2
      %p148 = por %p146, %p147
      %p150 = scmp.ne.s32.totalorder %s133, %s149
      %p151 = scmp.eq.s32.totalorder %s22, 0
      %p152 = por %p150, %p151
      %p153 = scmp.le.s32.totalorder 1, %s16
      %p154 = scmp.lt.s32.totalorder %s16, 4
      %p155 = pnand %p153, %p154
      %p156 = pneg %p155
      // Predicated region
      $region9: #{tpu_custom_call.1} parent=5 // pred_check
        _
      $region10: #{tpu_custom_call.1} parent=5 // pred_check_branch
        %158 = sbr.rel (%p155) target = $region12
      $region11: #{tpu_custom_call.1} parent=5 // pred_region
        %s159 = ssub.s32 %s16, 1
        // Predicated region
        $region13: #{tpu_custom_call.1} parent=11 // pred_check
          %p160 = pneg %p91
        $region14: #{tpu_custom_call.1} parent=11 // pred_check_branch
          %162 = sbr.rel (%p160) target = $region16
        $region15: #{tpu_custom_call.1} parent=11 // pred_region
          %s163 = smul.u32 16, %s28
          %s165 = ssub.s32 2048, 2048
          %166 = vsyncadd [#allocation7], %s165
          %s167 = sadd.s32 %s27, %s163
          %s168 = smul.addr %s167, 128
          %s169 = scalar_lea.hbm %s1, %s168
          %s170 = sshll.u32 [#allocation6], 4
          %s171 = int_to_ptr.vmem [resolvable:$true] %s170
          %176 = dma.hbm_to_vmem [thread:$0]  %s169, 2048, %s171, [#allocation7], 128, 128, 8
        $region16: #{tpu_custom_call.1} parent=11 // pred_fallthru
          _
        // Predicated region
        $region17: #{tpu_custom_call.1} parent=11 // pred_check
          %p177 = pneg %p117
        $region18: #{tpu_custom_call.1} parent=11 // pred_check_branch
          %179 = sbr.rel (%p177) target = $region20
        $region19: #{tpu_custom_call.1} parent=11 // pred_region
          %p180 = scmp.lt.s32.totalorder %s27, 0
          %s181 = scalar_select %p180, %s27, 0
          %s182 = scalar_lea.vmem %s2, %s181
        $region20: #{tpu_custom_call.1} parent=11 // pred_fallthru
          _
      $region12: #{tpu_custom_call.1} parent=5 // pred_fallthru
        _
      %p183 = scmp.lt.s32.totalorder %s16, 3
      // Predicated region
      $region21: #{tpu_custom_call.1} parent=5 // pred_check
        %p184 = pneg %p183
      $region22: #{tpu_custom_call.1} parent=5 // pred_check_branch
        %186 = sbr.rel (%p184) target = $region24
      $region23: #{tpu_custom_call.1} parent=5 // pred_region
        // Predicated region
        $region25: #{tpu_custom_call.1} parent=23 // pred_check
          %p187 = pneg %p57
        $region26: #{tpu_custom_call.1} parent=23 // pred_check_branch
          %189 = sbr.rel (%p187) target = $region28
        $region27: #{tpu_custom_call.1} parent=23 // pred_region
          %s190 = sand.u32 %s47, 1
          %s191 = scalar_lea.sflag [#allocation4], %s190
          %s192 = sand.u32 %s47, 1
          %s193 = smul.addr %s192, 128
          %s194 = scalar_lea.vmem [#allocation3], %s193
          %s195 = smul.u32 16, %s23
          %s197 = ssub.s32 2048, 2048
          %198 = vsyncadd %s191, %s197
          %s199 = sadd.s32 %s25, %s195
          %s200 = smul.addr %s199, 128
          %s201 = scalar_lea.hbm %s0, %s200
          %s202 = sshll.u32 %s194, 4
          %s203 = int_to_ptr.vmem [resolvable:$true] %s202
          %208 = dma.hbm_to_vmem [thread:$0]  %s201, 2048, %s203, %s191, 128, 128, 8
        $region28: #{tpu_custom_call.1} parent=23 // pred_fallthru
          _
      $region24: #{tpu_custom_call.1} parent=5 // pred_fallthru
        _
      %p209 = scmp.le.s32.totalorder 1, %s16
      %p210 = scmp.lt.s32.totalorder %s16, 4
      %p211 = pnand %p209, %p210
      %p212 = pneg %p211
      // Predicated region
      $region29: #{tpu_custom_call.1} parent=5 // pred_check
        _
      $region30: #{tpu_custom_call.1} parent=5 // pred_check_branch
        %214 = sbr.rel (%p211) target = $region32
      $region31: #{tpu_custom_call.1} parent=5 // pred_region
        %s215 = ssub.s32 %s16, 1
        %s216 = sand.u32 %s50, 1
        %s217 = scalar_lea.sflag [#allocation4], %s216
        %s218 = sand.u32 %s50, 1
        %s219 = smul.addr %s218, 128
        %s220 = scalar_lea.vmem [#allocation3], %s219
        // Predicated region
        $region33: #{tpu_custom_call.1} parent=31 // pred_check
          %p221 = pneg %p63
        $region34: #{tpu_custom_call.1} parent=31 // pred_check_branch
          %223 = sbr.rel (%p221) target = $region36
        $region35: #{tpu_custom_call.1} parent=31 // pred_region
          %224 = dma.done %s217, 2048
        $region36: #{tpu_custom_call.1} parent=31 // pred_fallthru
          _
        // Predicated region
        $region37: #{tpu_custom_call.1} parent=31 // pred_check
          %p225 = pneg %p91
        $region38: #{tpu_custom_call.1} parent=31 // pred_check_branch
          %227 = sbr.rel (%p225) target = $region40
        $region39: #{tpu_custom_call.1} parent=31 // pred_region
          %228 = dma.done [#allocation7], 2048
        $region40: #{tpu_custom_call.1} parent=31 // pred_fallthru
          _
        %s229 = sand.u32 %s50, 1
        %s230 = scalar_lea.sflag [#allocation4], %s229
        %s231 = sand.u32 %s50, 1
        %s232 = smul.addr %s231, 128
        %s233 = scalar_lea.vmem [#allocation3], %s232
        %p234 = pneg %p63
        %p235 = pneg %p60
        %p236 = pneg %p91
        %p237 = pneg %p88
        %p238 = scmp.lt.s32.totalorder %s27, 0
        %s239 = scalar_select %p238, %s27, 0
        %s240 = scalar_lea.vmem %s2, %s239
        %p241 = pneg %p117
        %p242 = pneg %p114
        %p243 = pneg %p145
        %p244 = pneg %p142
        %s245 = sand.u32 %s132, 1
        %s246 = scalar_lea.sflag [#allocation5], %s245
        %s247 = sand.u32 %s132, 1
        %s248 = smul.addr %s247, 128
        %s249 = scalar_lea.vmem [#allocation8], %s248
        %s250 = smul.u32 16, %s26
        %s251 = smul.u32 16, %s28
        %p252 = scmp.lt.s32.totalorder %s27, 0
        %s253 = scalar_select %p252, %s27, 0
        %s254 = scalar_lea.vmem %s2, %s253
        %s255 = smul.u32 16, %s26
        %p256 = scmp.eq.s32.totalorder %s28, 0
        // Predicated region
        $region41: #{tpu_custom_call.1} parent=31 // pred_check
          %p257 = pneg %p256
        $region42: #{tpu_custom_call.1} parent=31 // pred_check_branch
          %259 = sbr.rel (%p257) target = $region44
        $region43: #{tpu_custom_call.1} parent=31 // pred_region
          %260 = vst [vmem:[#allocation2] sm:$0xff] 0.0
          %261 = vst [vmem:[#allocation2 + $0x8] sm:$0xff] 0.0
          %262 = vst [vmem:[#allocation2 + $0x10] sm:$0xff] 0.0
          %263 = vst [vmem:[#allocation2 + $0x18] sm:$0xff] 0.0
          %264 = vst [vmem:[#allocation2 + $0x20] sm:$0xff] 0.0
          %265 = vst [vmem:[#allocation2 + $0x28] sm:$0xff] 0.0
          %266 = vst [vmem:[#allocation2 + $0x30] sm:$0xff] 0.0
          %267 = vst [vmem:[#allocation2 + $0x38] sm:$0xff] 0.0
          %268 = vst [vmem:[#allocation2 + $0x40] sm:$0xff] 0.0
          %269 = vst [vmem:[#allocation2 + $0x48] sm:$0xff] 0.0
          %270 = vst [vmem:[#allocation2 + $0x50] sm:$0xff] 0.0
          %271 = vst [vmem:[#allocation2 + $0x58] sm:$0xff] 0.0
          %272 = vst [vmem:[#allocation2 + $0x60] sm:$0xff] 0.0
          %273 = vst [vmem:[#allocation2 + $0x68] sm:$0xff] 0.0
          %274 = vst [vmem:[#allocation2 + $0x70] sm:$0xff] 0.0
          %275 = vst [vmem:[#allocation2 + $0x78] sm:$0xff] 0.0
        $region44: #{tpu_custom_call.1} parent=31 // pred_fallthru
          _
        %v276 = vld [vmem:[#allocation2] sm:$0xff]
        %v277 = vld [vmem:[#allocation2 + $0x8] sm:$0xff]
        %v278 = vld [vmem:[#allocation2 + $0x10] sm:$0xff]
        %v279 = vld [vmem:[#allocation2 + $0x18] sm:$0xff]
        %v280 = vld [vmem:[#allocation2 + $0x20] sm:$0xff]
        %v281 = vld [vmem:[#allocation2 + $0x28] sm:$0xff]
        %v282 = vld [vmem:[#allocation2 + $0x30] sm:$0xff]
        %v283 = vld [vmem:[#allocation2 + $0x38] sm:$0xff]
        %v284 = vld [vmem:[#allocation2 + $0x40] sm:$0xff]
        %v285 = vld [vmem:[#allocation2 + $0x48] sm:$0xff]
        %v286 = vld [vmem:[#allocation2 + $0x50] sm:$0xff]
        %v287 = vld [vmem:[#allocation2 + $0x58] sm:$0xff]
        %v288 = vld [vmem:[#allocation2 + $0x60] sm:$0xff]
        %v289 = vld [vmem:[#allocation2 + $0x68] sm:$0xff]
        %v290 = vld [vmem:[#allocation2 + $0x70] sm:$0xff]
        %v291 = vld [vmem:[#allocation2 + $0x78] sm:$0xff]
        %v292 = vld [vmem:[%s220] sm:$0xff]
        %v293 = vld [vmem:[%s220 + $0x8] sm:$0xff]
        %v294 = vld [vmem:[%s220 + $0x10] sm:$0xff]
        %v295 = vld [vmem:[%s220 + $0x18] sm:$0xff]
        %v296 = vld [vmem:[%s220 + $0x20] sm:$0xff]
        %v297 = vld [vmem:[%s220 + $0x28] sm:$0xff]
        %v298 = vld [vmem:[%s220 + $0x30] sm:$0xff]
        %v299 = vld [vmem:[%s220 + $0x38] sm:$0xff]
        %v300 = vld [vmem:[%s220 + $0x40] sm:$0xff]
        %v301 = vld [vmem:[%s220 + $0x48] sm:$0xff]
        %v302 = vld [vmem:[%s220 + $0x50] sm:$0xff]
        %v303 = vld [vmem:[%s220 + $0x58] sm:$0xff]
        %v304 = vld [vmem:[%s220 + $0x60] sm:$0xff]
        %v305 = vld [vmem:[%s220 + $0x68] sm:$0xff]
        %v306 = vld [vmem:[%s220 + $0x70] sm:$0xff]
        %v307 = vld [vmem:[%s220 + $0x78] sm:$0xff]
        %v308 = vld [vmem:[#allocation6] sm:$0xff]
        %v309 = vld [vmem:[#allocation6 + $0x8] sm:$0xff]
        %v310 = vld [vmem:[#allocation6 + $0x10] sm:$0xff]
        %v311 = vld [vmem:[#allocation6 + $0x18] sm:$0xff]
        %v312 = vld [vmem:[#allocation6 + $0x20] sm:$0xff]
        %v313 = vld [vmem:[#allocation6 + $0x28] sm:$0xff]
        %v314 = vld [vmem:[#allocation6 + $0x30] sm:$0xff]
        %v315 = vld [vmem:[#allocation6 + $0x38] sm:$0xff]
        %v316 = vld [vmem:[#allocation6 + $0x40] sm:$0xff]
        %v317 = vld [vmem:[#allocation6 + $0x48] sm:$0xff]
        %v318 = vld [vmem:[#allocation6 + $0x50] sm:$0xff]
        %v319 = vld [vmem:[#allocation6 + $0x58] sm:$0xff]
        %v320 = vld [vmem:[#allocation6 + $0x60] sm:$0xff]
        %v321 = vld [vmem:[#allocation6 + $0x68] sm:$0xff]
        %v322 = vld [vmem:[#allocation6 + $0x70] sm:$0xff]
        %v323 = vld [vmem:[#allocation6 + $0x78] sm:$0xff]
        %324 = vmatprep.subr.mxu0 0.0
        %325 = vmatpush1.msra.mxu0 %v308
        %326 = vmatprep.subr.mxu0 0.0
        %327 = vmatpush1.msra.mxu0 %v309
        %328 = vmatprep.subr.mxu0 0.0
        %329 = vmatpush1.msra.mxu0 %v310
        %330 = vmatprep.subr.mxu0 0.0
        %331 = vmatpush1.msra.mxu0 %v311
        %332 = vmatprep.subr.mxu0 0.0
        %333 = vmatpush1.msra.mxu0 %v312
        %334 = vmatprep.subr.mxu0 0.0
        %335 = vmatpush1.msra.mxu0 %v313
        %336 = vmatprep.subr.mxu0 0.0
        %337 = vmatpush1.msra.mxu0 %v314
        %338 = vmatprep.subr.mxu0 0.0
        %339 = vmatpush1.msra.mxu0 %v315
        %340 = vmatprep.subr.mxu0 0.0
        %341 = vmatpush1.msra.mxu0 %v316
        %342 = vmatprep.subr.mxu0 0.0
        %343 = vmatpush1.msra.mxu0 %v317
        %344 = vmatprep.subr.mxu0 0.0
        %345 = vmatpush1.msra.mxu0 %v318
        %346 = vmatprep.subr.mxu0 0.0
        %347 = vmatpush1.msra.mxu0 %v319
        %348 = vmatprep.subr.mxu0 0.0
        %349 = vmatpush1.msra.mxu0 %v320
        %350 = vmatprep.subr.mxu0 0.0
        %351 = vmatpush1.msra.mxu0 %v321
        %352 = vmatprep.subr.mxu0 0.0
        %353 = vmatpush1.msra.mxu0 %v322
        %354 = vmatprep.subr.mxu0 0.0
        %355 = vmatpush1.msra.mxu0 %v323
        %356 = vmatprep.subr.mxu0 0.0
        %357 = vmatpush1.msra.mxu0 0.0
        %358 = vmatprep.subr.mxu0 0.0
        %359 = vmatpush1.msra.mxu0 0.0
        %360 = vmatprep.subr.mxu0 0.0
        %361 = vmatpush1.msra.mxu0 0.0
        %362 = vmatprep.subr.mxu0 0.0
        %363 = vmatpush1.msra.mxu0 0.0
        %364 = vmatprep.subr.mxu0 0.0
        %365 = vmatpush1.msra.mxu0 0.0
        %366 = vmatprep.subr.mxu0 0.0
        %367 = vmatpush1.msra.mxu0 0.0
        %368 = vmatprep.subr.mxu0 0.0
        %369 = vmatpush1.msra.mxu0 0.0
        %370 = vmatprep.subr.mxu0 0.0
        %371 = vmatpush1.msra.mxu0 0.0
        %372 = vmatprep.subr.mxu0 0.0
        %373 = vmatpush1.msra.mxu0 0.0
        %374 = vmatprep.subr.mxu0 0.0
        %375 = vmatpush1.msra.mxu0 0.0
        %376 = vmatprep.subr.mxu0 0.0
        %377 = vmatpush1.msra.mxu0 0.0
        %378 = vmatprep.subr.mxu0 0.0
        %379 = vmatpush1.msra.mxu0 0.0
        %380 = vmatprep.subr.mxu0 0.0
        %381 = vmatpush1.msra.mxu0 0.0
        %382 = vmatprep.subr.mxu0 0.0
        %383 = vmatpush1.msra.mxu0 0.0
        %384 = vmatprep.subr.mxu0 0.0
        %385 = vmatpush1.msra.mxu0 0.0
        %386 = vmatprep.subr.mxu0 0.0
        %387 = vmatpush1.msra.mxu0 0.0
        %388 = vmatprep.mubr.f32.mxu0 0.0
        %389 = vmatmul.mubr.f32.gmra.mrb[0].mxu0 %v292
        %v390 = vpop.f32.mrb[0].mxu0
        %v391 = vadd.f32 0.0, %v390
        %v392 = vpop.f32.mrb[0].mxu0
        %393 = vmatprep.mubr.f32.mxu0 0.0
        %394 = vmatmul.mubr.f32.gmra.mrb[0].mxu0 %v293
        %v395 = vpop.f32.mrb[0].mxu0
        %v396 = vadd.f32 0.0, %v395
        %v397 = vpop.f32.mrb[0].mxu0
        %398 = vmatprep.mubr.f32.mxu0 0.0
        %399 = vmatmul.mubr.f32.gmra.mrb[0].mxu0 %v294
        %v400 = vpop.f32.mrb[0].mxu0
        %v401 = vadd.f32 0.0, %v400
        %v402 = vpop.f32.mrb[0].mxu0
        %403 = vmatprep.mubr.f32.mxu0 0.0
        %404 = vmatmul.mubr.f32.gmra.mrb[0].mxu0 %v295
        %v405 = vpop.f32.mrb[0].mxu0
        %v406 = vadd.f32 0.0, %v405
        %v407 = vpop.f32.mrb[0].mxu0
        %408 = vmatprep.mubr.f32.mxu0 0.0
        %409 = vmatmul.mubr.f32.gmra.mrb[0].mxu0 %v296
        %v410 = vpop.f32.mrb[0].mxu0
        %v411 = vadd.f32 0.0, %v410
        %v412 = vpop.f32.mrb[0].mxu0
        %413 = vmatprep.mubr.f32.mxu0 0.0
        %414 = vmatmul.mubr.f32.gmra.mrb[0].mxu0 %v297
        %v415 = vpop.f32.mrb[0].mxu0
        %v416 = vadd.f32 0.0, %v415
        %v417 = vpop.f32.mrb[0].mxu0
        %418 = vmatprep.mubr.f32.mxu0 0.0
        %419 = vmatmul.mubr.f32.gmra.mrb[0].mxu0 %v298
        %v420 = vpop.f32.mrb[0].mxu0
        %v421 = vadd.f32 0.0, %v420
        %v422 = vpop.f32.mrb[0].mxu0
        %423 = vmatprep.mubr.f32.mxu0 0.0
        %424 = vmatmul.mubr.f32.gmra.mrb[0].mxu0 %v299
        %v425 = vpop.f32.mrb[0].mxu0
        %v426 = vadd.f32 0.0, %v425
        %v427 = vpop.f32.mrb[0].mxu0
        %428 = vmatprep.mubr.f32.mxu0 0.0
        %429 = vmatmul.mubr.f32.gmra.mrb[0].mxu0 %v300
        %v430 = vpop.f32.mrb[0].mxu0
        %v431 = vadd.f32 0.0, %v430
        %v432 = vpop.f32.mrb[0].mxu0
        %433 = vmatprep.mubr.f32.mxu0 0.0
        %434 = vmatmul.mubr.f32.gmra.mrb[0].mxu0 %v301
        %v435 = vpop.f32.mrb[0].mxu0
        %v436 = vadd.f32 0.0, %v435
        %v437 = vpop.f32.mrb[0].mxu0
        %438 = vmatprep.mubr.f32.mxu0 0.0
        %439 = vmatmul.mubr.f32.gmra.mrb[0].mxu0 %v302
        %v440 = vpop.f32.mrb[0].mxu0
        %v441 = vadd.f32 0.0, %v440
        %v442 = vpop.f32.mrb[0].mxu0
        %443 = vmatprep.mubr.f32.mxu0 0.0
        %444 = vmatmul.mubr.f32.gmra.mrb[0].mxu0 %v303
        %v445 = vpop.f32.mrb[0].mxu0
        %v446 = vadd.f32 0.0, %v445
        %v447 = vpop.f32.mrb[0].mxu0
        %448 = vmatprep.mubr.f32.mxu0 0.0
        %449 = vmatmul.mubr.f32.gmra.mrb[0].mxu0 %v304
        %v450 = vpop.f32.mrb[0].mxu0
        %v451 = vadd.f32 0.0, %v450
        %v452 = vpop.f32.mrb[0].mxu0
        %453 = vmatprep.mubr.f32.mxu0 0.0
        %454 = vmatmul.mubr.f32.gmra.mrb[0].mxu0 %v305
        %v455 = vpop.f32.mrb[0].mxu0
        %v456 = vadd.f32 0.0, %v455
        %v457 = vpop.f32.mrb[0].mxu0
        %458 = vmatprep.mubr.f32.mxu0 0.0
        %459 = vmatmul.mubr.f32.gmra.mrb[0].mxu0 %v306
        %v460 = vpop.f32.mrb[0].mxu0
        %v461 = vadd.f32 0.0, %v460
        %v462 = vpop.f32.mrb[0].mxu0
        %463 = vmatprep.mubr.f32.mxu0 0.0
        %464 = vmatmul.mubr.f32.gmra.mrb[0].mxu0 %v307
        %v465 = vpop.f32.mrb[0].mxu0
        %v466 = vadd.f32 0.0, %v465
        %v467 = vpop.f32.mrb[0].mxu0
        %468 = vdwg.mxu0
        %v469 = vadd.f32 %v276, %v391
        %v470 = vadd.f32 %v277, %v396
        %v471 = vadd.f32 %v278, %v401
        %v472 = vadd.f32 %v279, %v406
        %v473 = vadd.f32 %v280, %v411
        %v474 = vadd.f32 %v281, %v416
        %v475 = vadd.f32 %v282, %v421
        %v476 = vadd.f32 %v283, %v426
        %v477 = vadd.f32 %v284, %v431
        %v478 = vadd.f32 %v285, %v436
        %v479 = vadd.f32 %v286, %v441
        %v480 = vadd.f32 %v287, %v446
        %v481 = vadd.f32 %v288, %v451
        %v482 = vadd.f32 %v289, %v456
        %v483 = vadd.f32 %v290, %v461
        %v484 = vadd.f32 %v291, %v466
        %485 = vst [vmem:[#allocation2] sm:$0xff] %v469
        %486 = vst [vmem:[#allocation2 + $0x8] sm:$0xff] %v470
        %487 = vst [vmem:[#allocation2 + $0x10] sm:$0xff] %v471
        %488 = vst [vmem:[#allocation2 + $0x18] sm:$0xff] %v472
        %489 = vst [vmem:[#allocation2 + $0x20] sm:$0xff] %v473
        %490 = vst [vmem:[#allocation2 + $0x28] sm:$0xff] %v474
        %491 = vst [vmem:[#allocation2 + $0x30] sm:$0xff] %v475
        %492 = vst [vmem:[#allocation2 + $0x38] sm:$0xff] %v476
        %493 = vst [vmem:[#allocation2 + $0x40] sm:$0xff] %v477
        %494 = vst [vmem:[#allocation2 + $0x48] sm:$0xff] %v478
        %495 = vst [vmem:[#allocation2 + $0x50] sm:$0xff] %v479
        %496 = vst [vmem:[#allocation2 + $0x58] sm:$0xff] %v480
        %497 = vst [vmem:[#allocation2 + $0x60] sm:$0xff] %v481
        %498 = vst [vmem:[#allocation2 + $0x68] sm:$0xff] %v482
        %499 = vst [vmem:[#allocation2 + $0x70] sm:$0xff] %v483
        %500 = vst [vmem:[#allocation2 + $0x78] sm:$0xff] %v484
        // Predicated region
        $region45: #{tpu_custom_call.1} parent=31 // pred_check
          %p501 = pneg %p256
        $region46: #{tpu_custom_call.1} parent=31 // pred_check_branch
          %503 = sbr.rel (%p501) target = $region48
        $region47: #{tpu_custom_call.1} parent=31 // pred_region
          %v504 = vld [vmem:[#allocation2] sm:$0xff]
          %v505 = vld [vmem:[#allocation2 + $0x8] sm:$0xff]
          %v506 = vld [vmem:[#allocation2 + $0x10] sm:$0xff]
          %v507 = vld [vmem:[#allocation2 + $0x18] sm:$0xff]
          %v508 = vld [vmem:[#allocation2 + $0x20] sm:$0xff]
          %v509 = vld [vmem:[#allocation2 + $0x28] sm:$0xff]
          %v510 = vld [vmem:[#allocation2 + $0x30] sm:$0xff]
          %v511 = vld [vmem:[#allocation2 + $0x38] sm:$0xff]
          %v512 = vld [vmem:[#allocation2 + $0x40] sm:$0xff]
          %v513 = vld [vmem:[#allocation2 + $0x48] sm:$0xff]
          %v514 = vld [vmem:[#allocation2 + $0x50] sm:$0xff]
          %v515 = vld [vmem:[#allocation2 + $0x58] sm:$0xff]
          %v516 = vld [vmem:[#allocation2 + $0x60] sm:$0xff]
          %v517 = vld [vmem:[#allocation2 + $0x68] sm:$0xff]
          %v518 = vld [vmem:[#allocation2 + $0x70] sm:$0xff]
          %v519 = vld [vmem:[#allocation2 + $0x78] sm:$0xff]
          %v520 = vld [vmem:[%s254] sm:$0x1]
          %v522 = vlaneseq
          %v523 = vshrl.u32 %v522, 7
          %v524 = vsub.s32 0, %v523
          %v525 = vrot.slane %v520, %v524
          %v527 = vadd.f32 %v504, %v525
          %v528 = vadd.f32 %v505, %v525
          %v529 = vadd.f32 %v506, %v525
          %v530 = vadd.f32 %v507, %v525
          %v531 = vadd.f32 %v508, %v525
          %v532 = vadd.f32 %v509, %v525
          %v533 = vadd.f32 %v510, %v525
          %v534 = vadd.f32 %v511, %v525
          %v535 = vadd.f32 %v512, %v525
          %v536 = vadd.f32 %v513, %v525
          %v537 = vadd.f32 %v514, %v525
          %v538 = vadd.f32 %v515, %v525
          %v539 = vadd.f32 %v516, %v525
          %v540 = vadd.f32 %v517, %v525
          %v541 = vadd.f32 %v518, %v525
          %v542 = vadd.f32 %v519, %v525
          %543 = vst [vmem:[%s249] sm:$0xff] %v527
          %544 = vst [vmem:[%s249 + $0x8] sm:$0xff] %v528
          %545 = vst [vmem:[%s249 + $0x10] sm:$0xff] %v529
          %546 = vst [vmem:[%s249 + $0x18] sm:$0xff] %v530
          %547 = vst [vmem:[%s249 + $0x20] sm:$0xff] %v531
          %548 = vst [vmem:[%s249 + $0x28] sm:$0xff] %v532
          %549 = vst [vmem:[%s249 + $0x30] sm:$0xff] %v533
          %550 = vst [vmem:[%s249 + $0x38] sm:$0xff] %v534
          %551 = vst [vmem:[%s249 + $0x40] sm:$0xff] %v535
          %552 = vst [vmem:[%s249 + $0x48] sm:$0xff] %v536
          %553 = vst [vmem:[%s249 + $0x50] sm:$0xff] %v537
          %554 = vst [vmem:[%s249 + $0x58] sm:$0xff] %v538
          %555 = vst [vmem:[%s249 + $0x60] sm:$0xff] %v539
          %556 = vst [vmem:[%s249 + $0x68] sm:$0xff] %v540
          %557 = vst [vmem:[%s249 + $0x70] sm:$0xff] %v541
          %558 = vst [vmem:[%s249 + $0x78] sm:$0xff] %v542
        $region48: #{tpu_custom_call.1} parent=31 // pred_fallthru
          _
        %s559 = sand.u32 %s132, 1
        %s560 = scalar_lea.sflag [#allocation5], %s559
        %s561 = sand.u32 %s132, 1
        %s562 = smul.addr %s561, 128
        %s563 = scalar_lea.vmem [#allocation8], %s562
        // Predicated region
        $region49: #{tpu_custom_call.1} parent=31 // pred_check
          %p564 = pneg %p142
        $region50: #{tpu_custom_call.1} parent=31 // pred_check_branch
          %566 = sbr.rel (%p564) target = $region52
        $region51: #{tpu_custom_call.1} parent=31 // pred_region
          %s567 = smul.u32 16, %s26
          %s569 = ssub.s32 2048, 2048
          %570 = vsyncadd %s560, %s569
          %s571 = sadd.s32 %s27, %s567
          %s572 = smul.addr %s571, 128
          %s573 = scalar_lea.hbm %s3, %s572
          %s574 = sshll.u32 %s563, 4
          %s575 = int_to_ptr.vmem [resolvable:$true] %s574
          %580 = dma.vmem_to_hbm [thread:$0]  %s575, 2048, %s573, %s560, 128, 128, 8
        $region52: #{tpu_custom_call.1} parent=31 // pred_fallthru
          _
      $region32: #{tpu_custom_call.1} parent=5 // pred_fallthru
        _
      %p581 = scmp.le.s32.totalorder 2, %s16
      // Predicated region
      $region53: #{tpu_custom_call.1} parent=5 // pred_check
        %p582 = pneg %p581
      $region54: #{tpu_custom_call.1} parent=5 // pred_check_branch
        %584 = sbr.rel (%p582) target = $region56
      $region55: #{tpu_custom_call.1} parent=5 // pred_region
        %s585 = ssub.s32 %s16, 2
        // Predicated region
        $region57: #{tpu_custom_call.1} parent=55 // pred_check
          %p586 = pneg %p148
        $region58: #{tpu_custom_call.1} parent=55 // pred_check_branch
          %588 = sbr.rel (%p586) target = $region60
        $region59: #{tpu_custom_call.1} parent=55 // pred_region
          %s589 = sand.u32 %s133, 1
          %s590 = scalar_lea.sflag [#allocation5], %s589
          %s591 = sand.u32 %s133, 1
          %s592 = smul.addr %s591, 128
          %s593 = scalar_lea.vmem [#allocation8], %s592
          %594 = dma.done %s590, 2048
        $region60: #{tpu_custom_call.1} parent=55 // pred_fallthru
          _
      $region56: #{tpu_custom_call.1} parent=5 // pred_fallthru
        _
    $region6: #{tpu_custom_call.1} parent=1 // loop_footer
      %s20 = sadd.s32 1, %s16
    $region7: #{tpu_custom_call.1} parent=1 // loop_footer_branch
      %15 = sbr.rel target = $region3
    $region8: #{tpu_custom_call.1} parent=1 // loop_exit
      _
    %595 = vsyncpa [#allocation4], 1
    %s596 = scalar_lea.sflag [#allocation4], 1
    %597 = vsyncpa %s596, 1
    %598 = vsyncpa [#allocation7], 1
    %599 = vsyncpa [#allocation5], 1
    %s600 = scalar_lea.sflag [#allocation5], 1
    %601 = vsyncpa %s600, 1

</llo_original>
